<compile_context>
chip_gen: v7x
topology: tpu7x:2x2x1
jax: 0.10.0
libtpu: 0.0.40
codegen_flags: <defaults>
</compile_context>

<pallas_src>
import functools
import math

import jax
import jax.numpy as jnp
from jax.experimental import pallas as pl
from jax.experimental.pallas import tpu as pltpu

_LN10000 = math.log(10000.0)
_HALF_PI = math.pi / 2.0
# 32-bit hash constants: golden-ratio seed mix + lowbias32 finalizer.
_GOLDEN_I32 = 0x9E3779B9 - (1 << 32)   # as signed int32
_MIX1_U32 = 0x7FEB352D
_MIX2_U32 = 0x846CA68B


def _pe_tile(t_rows, d_model, seq_off_i32):
    """(t_rows, d_model) float32 PE tile for sequence rows [off, off+t_rows).

    Sin-only formulation: cos(a) == sin(a + pi/2); per-column frequency is
    computed once on a (1, d_model) vector (no redundant EUP work).
    """
    pos = (jax.lax.broadcasted_iota(jnp.int32, (t_rows, 1), 0)
           + seq_off_i32).astype(jnp.float32)                        # (T, 1)
    col = jax.lax.broadcasted_iota(jnp.int32, (1, d_model), 1)       # (1, D)
    parity = col & 1                                                 # (1, D)
    freq = jnp.exp((col - parity).astype(jnp.float32)
                   * jnp.float32(-_LN10000 / d_model))               # (1, D)
    angle = pos * freq + parity.astype(jnp.float32) * jnp.float32(_HALF_PI)
    return jnp.sin(angle)                                            # (T, D)


def _pe_kernel(seed_ref, x_ref, o_ref, *, d_model, lane_batches, rows_tile,
               total_lanes, dropout_p, apply_dropout, compute_dtype):
    seq_off = pl.program_id(0) * rows_tile                           # i32 scalar
    pe = _pe_tile(rows_tile, d_model, seq_off)                       # (T, D) f32
    pe_c = pe.astype(compute_dtype)                                  # bf16 fast path

    if apply_dropout:
        inv_keep = jnp.asarray(1.0 / (1.0 - dropout_p), compute_dtype)
        threshold = jnp.uint32(min(int(round(dropout_p * 4294967296.0)),
                                   4294967295))
        # Globally unique per-element counter mixed with the seed, then
        # avalanche-hashed -> decorrelated dropout bits without pltpu.prng_*.
        seed_mix = seed_ref[0] * jnp.int32(_GOLDEN_I32)
        row_base = (jax.lax.broadcasted_iota(jnp.int32, (rows_tile, d_model), 0)
                    + seq_off) * jnp.int32(total_lanes)
        col_base = jax.lax.broadcasted_iota(jnp.int32, (rows_tile, d_model), 1)

    # Per-batch lane slices of width d_model: the same (T, D) PE is reused for
    # every slice, so no (T, B*D) PE tile is ever materialized in VMEM.
    # TODO(synk): if d_model % 128 != 0 these lane slices are not 128-aligned
    # (masked stores); the module fixes d_model=128 so this path is lane-dense.
    for b in range(lane_batches):
        sl = slice(b * d_model, (b + 1) * d_model)
        y = x_ref[:, sl].astype(compute_dtype) + pe_c
        if apply_dropout:
            idx = row_base + col_base + jnp.int32(b * d_model)
            h = (idx ^ seed_mix).astype(jnp.uint32)
            h = (h ^ (h >> 16)) * jnp.uint32(_MIX1_U32)
            h = (h ^ (h >> 15)) * jnp.uint32(_MIX2_U32)
            h = h ^ (h >> 16)
            keep = h >= threshold                    # keep with prob (1 - p)
            y = jnp.where(keep, y * inv_keep, jnp.zeros_like(y))
        o_ref[:, sl] = y.astype(o_ref.dtype)


def _pick_row_tile(rows, row_bytes, d_model,
                   vmem_budget_bytes=32 * 1024 * 1024):
    """Pick a seq tile: multiple of 8, multi-MiB blocks, >= 2 grid steps."""
    if rows <= 8:
        return rows
    # Per-row VMEM footprint: double-buffered input + output blocks (auto
    # pipeline) plus ~5 f32 (T, d_model) in-kernel temporaries (PE, hash
    # indices, compute slice).  Budget leaves headroom under the 48 MiB limit
    # (v7x has 64 MiB physical; v5e/v6e have 128 MiB, so this is conservative).
    per_row = 4 * row_bytes + 20 * d_model
    by_mem = max(8, (vmem_budget_bytes // max(per_row, 1)) // 8 * 8)
    # Keep >= 2 grid steps so ("parallel",) can shard across v7x's 2 TensorCores.
    half = -(-rows // 2)
    megacore_cap = max(8, ((half + 7) // 8) * 8)
    rows8 = (rows // 8) * 8
    limit = max(8, min(by_mem, megacore_cap, rows8 if rows8 else rows))
    # Prefer the largest multiple-of-8 divisor of rows (no partial tail block),
    # but don't shrink below half the target just to chase divisibility.
    t = limit
    while t >= 8:
        if rows % t == 0:
            return t
        if t * 2 < limit:
            break
        t -= 8
    return limit


def positional_encoding(x, *, dropout_p=0.1, training=False, seed=0,
                        seq_tile=None):
    """x: [S, B, D] float array. Returns dropout(x + pe[:S]) (eval: identity)."""
    S, B, D = x.shape
    assert D % 2 == 0, "d_model must be even"

    # Lane-dense layout: flatten (B, D) into one lane axis (row-major reshape,
    # no data movement).  Column c of the 2-D view maps to feature c % D.
    total_lanes = B * D
    x2 = x.reshape(S, total_lanes)
    itemsize = jnp.dtype(x.dtype).itemsize
    row_bytes = total_lanes * itemsize

    if seq_tile is None:
        seq_tile = _pick_row_tile(S, row_bytes, D)
    else:
        seq_tile = max(1, min(int(seq_tile), S))
        if seq_tile != S:
            seq_tile = min(max(8, (seq_tile // 8) * 8), S)   # 8-multiple or == S
    grid = (pl.cdiv(S, seq_tile),)

    compute_dtype = jnp.bfloat16 if x.dtype == jnp.bfloat16 else jnp.float32
    apply_dropout = bool(training) and float(dropout_p) > 0.0

    blk = pl.BlockSpec((seq_tile, total_lanes), lambda s, *_: (s, 0))
    compiler_params = pltpu.CompilerParams(
        dimension_semantics=("parallel",),            # megacore sharding on v7x
        vmem_limit_bytes=48 * 1024 * 1024,
    )
    cost = pl.CostEstimate(
        flops=2 * S * total_lanes,
        transcendentals=grid[0] * seq_tile * D,
        bytes_accessed=2 * S * total_lanes * itemsize,
    )
    kern = functools.partial(
        _pe_kernel, d_model=D, lane_batches=B, rows_tile=seq_tile,
        total_lanes=total_lanes, dropout_p=float(dropout_p),
        apply_dropout=apply_dropout, compute_dtype=compute_dtype)

    seed_arr = jnp.asarray(seed, dtype=jnp.int32).reshape((1,))
    out2 = pl.pallas_call(
        kern,
        out_shape=jax.ShapeDtypeStruct((S, total_lanes), x.dtype),
        grid_spec=pltpu.PrefetchScalarGridSpec(
            num_scalar_prefetch=1, grid=grid, in_specs=[blk], out_specs=blk),
        compiler_params=compiler_params,
        cost_estimate=cost,
    )(seed_arr, x2)
    return out2.reshape(S, B, D)


def _reference(x):
    """Pure-JAX reference matching the PyTorch module in eval mode."""
    S, B, D = x.shape
    position = jnp.arange(S, dtype=jnp.float32)[:, None]
    div_term = jnp.exp(
        jnp.arange(0, D, 2, dtype=jnp.float32) * (-math.log(10000.0) / D))
    pe = jnp.zeros((S, D), jnp.float32)
    pe = pe.at[:, 0::2].set(jnp.sin(position * div_term))
    pe = pe.at[:, 1::2].set(jnp.cos(position * div_term))
    return x + pe[:, None, :]


if __name__ == "__main__":
    # Small shapes consistent with the module: seq=8, batch=2, d_model=128.
    S, B, D = 8, 2, 128
    key = jax.random.PRNGKey(0)
    x = jax.random.normal(key, (S, B, D), dtype=jnp.float32)

    # Eval-mode forward (dropout == identity), checked vs the reference.
    out = jax.block_until_ready(positional_encoding(x, training=False))
    ref = _reference(x)
    assert out.shape == (S, B, D)
    assert jnp.allclose(out, ref, atol=1e-5, rtol=1e-5), "mismatch vs reference"

    # Multi-step grid with a partial tail block (auto tile picker), eval mode.
    S2, B2 = 40, 3
    x2 = jax.random.normal(jax.random.PRNGKey(1), (S2, B2, D), dtype=jnp.float32)
    out2 = jax.block_until_ready(positional_encoding(x2, training=False))
    assert jnp.allclose(out2, _reference(x2), atol=1e-5, rtol=1e-5), \
        "multi-block mismatch vs reference"

    # bf16 fast path (add happens in bf16 -> loose tolerance).
    xb = x.astype(jnp.bfloat16)
    outb = jax.block_until_ready(positional_encoding(xb, training=False))
    assert jnp.allclose(outb.astype(jnp.float32), ref, atol=5e-2, rtol=5e-2), \
        "bf16 path mismatch vs reference"

    # Training-mode forward: surviving elements must equal (x + pe)/(1 - p),
    # dropped elements are exactly 0.
    # TODO(synk): dropout uses an in-kernel counter-based hash, so the mask
    # bits are not bit-identical to torch's RNG stream (semantics preserved).
    p = 0.1
    out_tr = jax.block_until_ready(
        positional_encoding(x, dropout_p=p, training=True, seed=0))
    assert out_tr.shape == (S, B, D)
    scaled = ref / (1.0 - p)
    err = jnp.where(out_tr == 0.0, 0.0, jnp.abs(out_tr - scaled))
    assert jnp.all(err < 1e-4), "training-mode survivors mismatch"

    print("KERNEL_OK")
</pallas_src>

<mosaic_0001>
module attributes {stable_mosaic.version = 11 : i64} {
  func.func @_pe_kernel(%arg0: i32, %arg1: memref<1xi32, #tpu.memory_space<smem>>, %arg2: memref<8x256xf32, #tpu.memory_space<vmem>>, %arg3: memref<8x256xf32, #tpu.memory_space<vmem>>) attributes {dimension_semantics = [#tpu.dimension_semantics<parallel>], iteration_bounds = array<i64: 1>, scalar_prefetch = 1 : i64, scratch_operands = 0 : i64, tpu.core_type = #tpu.core_type<tc>, window_params = [{transform_indices = @transform_0, window_bounds = array<i64: 8, 256>}, {transform_indices = @transform_1, window_bounds = array<i64: 8, 256>}]} {
    %c8_i32 = arith.constant 8 : i32
    %0 = arith.muli %arg0, %c8_i32 : i32
    %1 = tpu.iota {dimensions = array<i32: 0>} : vector<8x1xi32>
    %2 = vector.broadcast %0 : i32 to vector<8x1xi32>
    %3 = arith.addi %1, %2 : vector<8x1xi32>
    %4 = arith.sitofp %3 : vector<8x1xi32> to vector<8x1xf32>
    %5 = tpu.iota {dimensions = array<i32: 1>} : vector<1x128xi32>
    %c1_i32 = arith.constant 1 : i32
    %6 = vector.broadcast %c1_i32 : i32 to vector<1x128xi32>
    %7 = arith.andi %5, %6 : vector<1x128xi32>
    %8 = arith.subi %5, %7 : vector<1x128xi32>
    %9 = arith.sitofp %8 : vector<1x128xi32> to vector<1x128xf32>
    %cst = arith.constant -0.0719557852 : f32
    %10 = vector.broadcast %cst : f32 to vector<1x128xf32>
    %11 = arith.mulf %9, %10 : vector<1x128xf32>
    %12 = math.exp %11 : vector<1x128xf32>
    %13 = vector.broadcast %4 : vector<8x1xf32> to vector<8x128xf32>
    %14 = vector.broadcast %12 : vector<1x128xf32> to vector<8x128xf32>
    %15 = arith.mulf %13, %14 : vector<8x128xf32>
    %16 = arith.sitofp %7 : vector<1x128xi32> to vector<1x128xf32>
    %cst_0 = arith.constant 1.57079637 : f32
    %17 = vector.broadcast %cst_0 : f32 to vector<1x128xf32>
    %18 = arith.mulf %16, %17 : vector<1x128xf32>
    %19 = vector.broadcast %18 : vector<1x128xf32> to vector<8x128xf32>
    %20 = arith.addf %15, %19 : vector<8x128xf32>
    %21 = math.sin %20 : vector<8x128xf32>
    %c0 = arith.constant 0 : index
    %c0_1 = arith.constant 0 : index
    %22 = vector.load %arg2[%c0, %c0_1] : memref<8x256xf32, #tpu.memory_space<vmem>>, vector<8x128xf32>
    %23 = arith.addf %22, %21 : vector<8x128xf32>
    %c0_2 = arith.constant 0 : index
    %c0_3 = arith.constant 0 : index
    %24 = vector.load %arg3[%c0_2, %c0_3] : memref<8x256xf32, #tpu.memory_space<vmem>>, vector<8x128xf32>
    tpu.vector_store %arg3[%c0_2, %c0_3], %23 {strides = array<i32>} : memref<8x256xf32, #tpu.memory_space<vmem>>, vector<8x128xf32>,
    %c0_4 = arith.constant 0 : index
    %c128 = arith.constant 128 : index
    %25 = vector.load %arg2[%c0_4, %c128] : memref<8x256xf32, #tpu.memory_space<vmem>>, vector<8x128xf32>
    %26 = arith.addf %25, %21 : vector<8x128xf32>
    %c0_5 = arith.constant 0 : index
    %c128_6 = arith.constant 128 : index
    %27 = vector.load %arg3[%c0_5, %c128_6] : memref<8x256xf32, #tpu.memory_space<vmem>>, vector<8x128xf32>
    tpu.vector_store %arg3[%c0_5, %c128_6], %26 {strides = array<i32>} : memref<8x256xf32, #tpu.memory_space<vmem>>, vector<8x128xf32>,
    return
  }
  func.func @transform_0(%arg0: i32, %arg1: memref<1xi32, #tpu.memory_space<smem>>) -> (i32, i32) {
    %c0_i32 = arith.constant 0 : i32
    %c0_i32_0 = arith.constant 0 : i32
    return %arg0, %c0_i32 : i32, i32
  }
  func.func @transform_1(%arg0: i32, %arg1: memref<1xi32, #tpu.memory_space<smem>>) -> (i32, i32) {
    %c0_i32 = arith.constant 0 : i32
    %c0_i32_0 = arith.constant 0 : i32
    return %arg0, %c0_i32 : i32, i32
  }
}

</mosaic_0001>

<llo_original>
// kernel: tpu_custom_call.1
$region0: #{tpu_custom_call.1}
  #allocation0 [shape = 'u32[]', space=smem, size = 0x4, offset = 0x4, fixed_abs, tag = 'smem constant byte address 0x4 - core index']
  #allocation1 [shape = 'u32[144,128]{1,0:T(1,128)}', space=vmem, size = 0x12000, scoped, tag = 'internal scratch']
  #allocation2 [shape = 's32[1]{0}', space=sflag, size = 0x4, scoped, tag = 'scoped memory for tpu_custom_call.1']
  #allocation3 [shape = 's32[1]{0:T(128)S(6)}', space=smem, size = 0x200, scoped, tag = 'prefetched SMEM operand 0']
  %s0 = inlined_call_operand.<no memory space> [shape: s32[1], index: 0, kind: input, shape index: {}]
  %s1 = inlined_call_operand.hbm [shape: f32[8,256], index: 1, kind: input, shape index: {}]
  %s2 = inlined_call_operand.hbm [shape: f32[8,256], index: 2, kind: output, shape index: {}]
  %s3 = sld [smem:[#allocation0]]
  $region18: #{tpu_custom_call.1} parent=0
    _
  %s5 = ssub.s32 1, %s3
  %s6 = scalar_select 0, %s5, %s3
  %7 = sst [smem:[#allocation3]] %s0
  $region1: #{tpu_custom_call.1} parent=0
    #allocation4 [shape = 'u8[8192]{0}', space=vmem, size = 0x2000, scoped, tag = 'input window, operand 1, single buffered']
    #allocation5 [shape = 's32[1]{0}', space=sflag, size = 0x4, scoped, tag = 'scoped memory for tpu_custom_call.1']
    #allocation6 [shape = 's32[1]{0}', space=sflag, size = 0x4, scoped, tag = 'scoped memory for tpu_custom_call.1']
    #allocation7 [shape = 'u8[8192]{0}', space=vmem, size = 0x2000, scoped, tag = 'output window, operand 0, single buffered']
    %8 = vsyncpa [#allocation5], 0
    %9 = vsyncpa [#allocation6], 0
    // Predicated region
    $region2: #{tpu_custom_call.1} parent=1 // pred_check
      _
    $region3: #{tpu_custom_call.1} parent=1 // pred_check_branch
      %11 = sbr.rel (0) target = $region5
    $region4: #{tpu_custom_call.1} parent=1 // pred_region
      %s13 = ssub.s32 256, 256
      %14 = vsyncadd [#allocation5], %s13
      %s16 = sshll.u32 [#allocation4], 4
      %s17 = int_to_ptr.vmem [resolvable:$true] %s16
      %19 = dma.hbm_to_vmem [thread:$0]  %s1, 256, %s17, [#allocation5]
    $region5: #{tpu_custom_call.1} parent=1 // pred_fallthru
      _
    // Predicated region
    $region6: #{tpu_custom_call.1} parent=1 // pred_check
      _
    $region7: #{tpu_custom_call.1} parent=1 // pred_check_branch
      %21 = sbr.rel (0) target = $region9
    $region8: #{tpu_custom_call.1} parent=1 // pred_region
      %22 = dma.done [#allocation5], 256
    $region9: #{tpu_custom_call.1} parent=1 // pred_fallthru
      _
    %s23 = smul.u32 0, 8
    %v24 = vlaneseq
    %v25 = vshrl.u32 %v24, 7
    %v26 = vstv %s23
    %v27 = vadd.s32 %v25, %v26
    %v28 = vcvt.s32.f32 %v27
    %v29 = vlaneseq
    %v30 = vand.u32 %v29, 127
    %v31 = vand.u32 %v30, 1
    %v32 = vsub.s32 %v30, %v31
    %v33 = vcvt.s32.f32 %v32
    %v34 = vmul.f32 %v33, -0.071955785
    %v35 = vmul.f32 %v34, 1.442695
    %v36 = vpow.pop %v35
    %v37 = vmul.f32 %v28, %v36
    %v38 = vcvt.s32.f32 %v31
    %v39 = vmul.f32 %v38, 1.5707964
    %v40 = vadd.f32 %v37, %v39
    %v41 = vand.u32 2147483647, %v40
    %vm42 = vcmp.le.f32.partialorder %v41, 0.7853982
    %vm43 = vcmp.lt.s32.totalorder %v40, 0
    %v44 = vand.u32 %v40, 2139095040
    %v45 = vshrl.u32 %v44, 23
    %v46 = vsub.s32 %v45, 127
    %v47 = vand.u32 2147483647, %v40
    %v48 = vand.u32 %v47, 8388607
    %v49 = vor.u32 %v48, 8388608
    %v50 = vsub.s32 0, %v49
    %v51 = vadd.s32 %v46, 1
    %vm52 = vcmp.gt.s32.totalorder %v51, 0
    %v53 = vsel %vm52, %v51, 0
    %v54 = vshrl.u32 %v53, 5
    %v55 = vand.u32 %v53, 31
    %v56 = vsub.s32 32, %v55
    %v57 = vshrl.u32 683565275, %v56
    %v58 = vshll.u32 683565275, %v55
    %v59 = vshrl.u32 2475754826, %v56
    %v60 = vor.u32 %v58, %v59
    %v61 = vshll.u32 2475754826, %v55
    %v62 = vshrl.u32 2131351028, %v56
    %v63 = vor.u32 %v61, %v62
    %v64 = vshll.u32 2131351028, %v55
    %v65 = vshrl.u32 2102212464, %v56
    %v66 = vor.u32 %v64, %v65
    %v67 = vshll.u32 2102212464, %v55
    %v68 = vshrl.u32 920167782, %v56
    %v69 = vor.u32 %v67, %v68
    %v70 = vshll.u32 920167782, %v55
    %v71 = vshrl.u32 1326507024, %v56
    %v72 = vor.u32 %v70, %v71
    %vm73 = vcmp.lt.s32.totalorder %v54, 1
    %vm74 = vcmp.lt.s32.totalorder %v54, 2
    %vm75 = vcmp.lt.s32.totalorder %v54, 3
    %vm76 = vcmp.lt.s32.totalorder %v54, 4
    %v77 = vsel %vm73, %v57, %v60
    %v78 = vsel %vm76, %v66, 2102212464
    %v79 = vsel %vm75, %v63, %v78
    %v80 = vsel %vm74, %v77, %v79
    %v81 = vsel %vm73, %v60, %v63
    %v82 = vsel %vm76, %v69, 920167782
    %v83 = vsel %vm75, %v66, %v82
    %v84 = vsel %vm74, %v81, %v83
    %v85 = vsel %vm73, %v63, %v66
    %v86 = vsel %vm76, %v72, 1326507024
    %v87 = vsel %vm75, %v69, %v86
    %v88 = vsel %vm74, %v85, %v87
    %v89 = vshll.u32 %v49, 8
    %v90 = vmul.u32.u64.compose %v89, %v88
    %v91 = vextract.low.u32 %v90
    %v92 = vextract.high.u32 %v90
    %v93 = vmul.u32.u64.compose %v89, %v84
    %v94 = vextract.low.u32 %v93
    %v95 = vextract.high.u32 %v93
    %v96 = vmul.u32 %v89, %v80
    %v97 = vadd.s32 %v92, %v94
    %vm98 = vc.u32 %v92, %v94
    %v99 = vadd.s32 %v95, 1
    %v100 = vsel %vm98, %v99, %v95
    %v101 = vadd.s32 %v96, %v100
    %v102 = vadd.s32 %v101, 536870912
    %v103 = vshrl.u32 %v102, 30
    %v104 = vshll.u32 %v103, 30
    %v105 = vsub.s32 %v101, %v104
    %vm106 = vcmp.lt.s32.totalorder %v105, 0
    %v107 = vsub.s32 0, %v105
    %v108 = vsel %vm106, %v107, %v105
    %v109 = vclz %v108
    %v110 = vsub.s32 %v109, 2
    %vm111 = vcmp.gt.s32.totalorder 0, %v110
    %v112 = vsel %vm111, 0, %v110
    %v113 = vsub.s32 32, %v112
    %v114 = vshll.u32 %v105, %v112
    %v115 = vshrl.u32 %v97, %v113
    %v116 = vor.u32 %v114, %v115
    %v117 = vsub.s32 4294967266, %v112
    %v118 = vadd.s32 %v117, 127
    %v119 = vshll.u32 %v118, 23
    %v120 = vor.u32 4788187, %v119
    %v121 = vand.u32 2147483647, %v120
    %v123 = vcvt.s32.f32 %v116
    %v124 = vmul.f32 %v123, %v121
    %v125 = vxor.u32 %v124, 2147483648
    %v126 = vsel %vm43, %v125, %v124
    %v127 = vsub.s32 4, %v103
    %v128 = vsel %vm43, %v127, %v103
    %v129 = vsel %vm42, %v40, %v126
    %v130 = vsel %vm42, 0, %v128
    %v131 = vcosq.f32.pop %v129
    %v132 = vsinq.f32.pop %v129
    %vm133 = vweird.f32 %v40
    %v134 = vadd.s32 %v130, 3
    %v135 = vand.u32 %v134, 3
    %vm136 = vcmp.lt.s32.totalorder %v135, 2
    %vm137 = vcmp.eq.s32.totalorder %v135, 0
    %v138 = vxor.u32 %v132, 2147483648
    %v139 = vsel %vm137, %v131, %v138
    %vm140 = vcmp.eq.s32.totalorder %v135, 2
    %v141 = vxor.u32 %v131, 2147483648
    %v142 = vsel %vm140, %v141, %v132
    %v143 = vsel %vm136, %v139, %v142
    %v144 = vsel %vm133, nan, %v143
    %v145 = vld [vmem:[#allocation4] sm:$0xff]
    %v146 = vadd.f32 %v145, %v144
    %147 = vst [vmem:[#allocation7] sm:$0xff] %v146
    %v148 = vld [vmem:[#allocation4 + $0x8] sm:$0xff]
    %v149 = vadd.f32 %v148, %v144
    %150 = vst [vmem:[#allocation7 + $0x8] sm:$0xff] %v149
    // Predicated region
    $region10: #{tpu_custom_call.1} parent=1 // pred_check
      _
    $region11: #{tpu_custom_call.1} parent=1 // pred_check_branch
      %152 = sbr.rel (0) target = $region13
    $region12: #{tpu_custom_call.1} parent=1 // pred_region
      %s154 = ssub.s32 256, 256
      %155 = vsyncadd [#allocation6], %s154
      %s157 = sshll.u32 [#allocation7], 4
      %s158 = int_to_ptr.vmem [resolvable:$true] %s157
      %160 = dma.vmem_to_hbm [thread:$0]  %s158, 256, %s2, [#allocation6]
    $region13: #{tpu_custom_call.1} parent=1 // pred_fallthru
      _
    // Predicated region
    $region14: #{tpu_custom_call.1} parent=1 // pred_check
      _
    $region15: #{tpu_custom_call.1} parent=1 // pred_check_branch
      %162 = sbr.rel (0) target = $region17
    $region16: #{tpu_custom_call.1} parent=1 // pred_region
      %163 = dma.done [#allocation6], 256
    $region17: #{tpu_custom_call.1} parent=1 // pred_fallthru
      _
    %164 = vsyncpa [#allocation5], 1
    %165 = vsyncpa [#allocation6], 1

</llo_original>
